<compile_context>
chip_gen: v6e
topology: v6e:2x2x1
jax: 0.10.0
libtpu: 0.0.40
codegen_flags: <defaults>
</compile_context>

<pallas_src>
import functools

import jax
import jax.numpy as jnp
from jax.experimental import pallas as pl
from jax.experimental.pallas import tpu as pltpu


LANE = 128


def _round_up(x, m):
    return (x + m - 1) // m * m


def _pick_tile(n_pad, target=256):
    """Largest 128-multiple tile <= target that divides n_pad."""
    t = min(target, n_pad)
    t -= t % LANE
    t = max(t, LANE)
    while n_pad % t != 0:
        t -= LANE
    return t


def _pad2(x, rows, cols):
    return jnp.pad(x, ((0, rows - x.shape[0]), (0, cols - x.shape[1])))


# ----------------------------- Pallas kernels ------------------------------

def project_kernel(x_ref, w_ref, o_ref):
    """Row tile of the feature projection: out[tile] = X[tile] @ W."""
    o_ref[...] = jnp.dot(
        x_ref[...], w_ref[...], preferred_element_type=jnp.float32
    ).astype(o_ref.dtype)


def aggregate_kernel(a_ref, xw_ref, b_ref, o_ref, acc_ref, *, apply_relu):
    """out[tile] = sum_k A_hat[tile, k_tile] @ XW[k_tile] (+ b, relu at end)."""
    k = pl.program_id(1)

    @pl.when(k == 0)
    def _():
        acc_ref[...] = jnp.zeros_like(acc_ref)

    acc_ref[...] += jnp.dot(
        a_ref[...], xw_ref[...], preferred_element_type=jnp.float32
    )

    @pl.when(k == pl.num_programs(1) - 1)
    def _():
        out = acc_ref[...] + b_ref[...]
        if apply_relu:
            out = jnp.maximum(out, 0.0)
        o_ref[...] = out.astype(o_ref.dtype)


def fused_small_kernel(a_ref, x_ref, w1_ref, b1_ref, w2_ref, b2_ref, o_ref):
    """Whole 2-layer GCN for graphs small enough to sit in VMEM."""
    a = a_ref[...]
    xw1 = jnp.dot(x_ref[...], w1_ref[...], preferred_element_type=jnp.float32)
    h = jnp.dot(a, xw1, preferred_element_type=jnp.float32) + b1_ref[...]
    h = jnp.maximum(h, 0.0).astype(x_ref.dtype)
    hw2 = jnp.dot(h, w2_ref[...], preferred_element_type=jnp.float32)
    out = jnp.dot(a, hw2, preferred_element_type=jnp.float32) + b2_ref[...]
    o_ref[...] = out.astype(o_ref.dtype)


# ------------------------------ Pallas wrappers -----------------------------

def project(x_p, w_p, *, tm):
    """XW = X @ W over row tiles of X (computed once per layer)."""
    n_pad, f_in_pad = x_p.shape
    f_out_pad = w_p.shape[1]
    return pl.pallas_call(
        project_kernel,
        out_shape=jax.ShapeDtypeStruct((n_pad, f_out_pad), x_p.dtype),
        grid=(n_pad // tm,),
        in_specs=[
            pl.BlockSpec((tm, f_in_pad), lambda i: (i, 0)),
            pl.BlockSpec((f_in_pad, f_out_pad), lambda i: (0, 0)),
        ],
        out_specs=pl.BlockSpec((tm, f_out_pad), lambda i: (i, 0)),
        compiler_params=pltpu.CompilerParams(
            dimension_semantics=("parallel",)),
    )(x_p, w_p)


def aggregate(a_p, xw_p, b_p, *, apply_relu, tm, tk):
    """out = A_hat @ XW + b (optionally relu), tiled over (rows, K)."""
    n_pad = a_p.shape[0]
    f_out_pad = xw_p.shape[1]
    kernel = functools.partial(aggregate_kernel, apply_relu=apply_relu)
    return pl.pallas_call(
        kernel,
        out_shape=jax.ShapeDtypeStruct((n_pad, f_out_pad), xw_p.dtype),
        grid=(n_pad // tm, n_pad // tk),
        in_specs=[
            pl.BlockSpec((tm, tk), lambda i, k: (i, k)),          # A_hat tile
            pl.BlockSpec((tk, f_out_pad), lambda i, k: (k, 0)),   # XW K-tile
            pl.BlockSpec((1, f_out_pad), lambda i, k: (0, 0)),    # bias row
        ],
        out_specs=pl.BlockSpec((tm, f_out_pad), lambda i, k: (i, 0)),
        scratch_shapes=[pltpu.VMEM((tm, f_out_pad), jnp.float32)],
        compiler_params=pltpu.CompilerParams(
            dimension_semantics=("parallel", "arbitrary")),
    )(a_p, xw_p, b_p)


def fused_small(a_p, x_p, w1_p, b1_p, w2_p, b2_p):
    """Single-kernel path for small graphs (everything resident in VMEM)."""
    n_pad, f_in_pad = x_p.shape
    hid_pad = w1_p.shape[1]
    f_out_pad = w2_p.shape[1]
    return pl.pallas_call(
        fused_small_kernel,
        out_shape=jax.ShapeDtypeStruct((n_pad, f_out_pad), x_p.dtype),
        grid=(1,),
        in_specs=[
            pl.BlockSpec((n_pad, n_pad), lambda i: (0, 0)),
            pl.BlockSpec((n_pad, f_in_pad), lambda i: (0, 0)),
            pl.BlockSpec((f_in_pad, hid_pad), lambda i: (0, 0)),
            pl.BlockSpec((1, hid_pad), lambda i: (0, 0)),
            pl.BlockSpec((hid_pad, f_out_pad), lambda i: (0, 0)),
            pl.BlockSpec((1, f_out_pad), lambda i: (0, 0)),
        ],
        out_specs=pl.BlockSpec((n_pad, f_out_pad), lambda i: (0, 0)),
        compiler_params=pltpu.CompilerParams(
            dimension_semantics=("arbitrary",)),
    )(a_p, x_p, w1_p, b1_p, w2_p, b2_p)


# ------------------------------- glue (JAX) ---------------------------------

def build_normalized_adjacency(edge_index, num_nodes):
    """Dense D^{-1/2}(A+I)D^{-1/2} matching PyG gcn_norm (source_to_target)."""
    src = edge_index[0]
    dst = edge_index[1]
    loop = jnp.arange(num_nodes, dtype=edge_index.dtype)
    src = jnp.concatenate([src, loop])
    dst = jnp.concatenate([dst, loop])
    # A[i, j] counts edges j -> i (scatter-add semantics, like PyG).
    adj = jnp.zeros((num_nodes, num_nodes), jnp.float32).at[dst, src].add(1.0)
    deg = adj.sum(axis=1)
    d_inv_sqrt = jnp.where(deg > 0, 1.0 / jnp.sqrt(deg), 0.0)
    return d_inv_sqrt[:, None] * adj * d_inv_sqrt[None, :]


def glorot(key, shape):
    fan_in, fan_out = shape
    limit = jnp.sqrt(6.0 / (fan_in + fan_out))
    return jax.random.uniform(key, shape, jnp.float32, -limit, limit)


def gcn_encoder_forward(x, edge_index, params, *, force_tiled=False,
                        small_graph_threshold=1024, tile=256):
    """2-layer GCN forward. Pads to lane-dense shapes, runs Pallas kernels,
    slices the result back to the unpadded shape."""
    n, f_in = x.shape
    hidden = params["w1"].shape[1]
    f_out = params["w2"].shape[1]

    n_pad = _round_up(n, LANE)
    f_in_pad = _round_up(f_in, LANE)
    hid_pad = _round_up(hidden, LANE)
    f_out_pad = _round_up(f_out, LANE)

    a_hat = build_normalized_adjacency(edge_index, n)

    a_p = _pad2(a_hat, n_pad, n_pad)
    x_p = _pad2(x, n_pad, f_in_pad)
    w1_p = _pad2(params["w1"], f_in_pad, hid_pad)
    w2_p = _pad2(params["w2"], hid_pad, f_out_pad)
    b1_p = _pad2(params["b1"].reshape(1, -1), 1, hid_pad)
    b2_p = _pad2(params["b2"].reshape(1, -1), 1, f_out_pad)

    if (not force_tiled) and n_pad <= small_graph_threshold:
        # Small graph: single fused kernel, A_hat + activations stay in VMEM.
        out_p = fused_small(a_p, x_p, w1_p, b1_p, w2_p, b2_p)
    else:
        # Scalable path: hoisted projection + K-tiled aggregation per layer.
        tm = _pick_tile(n_pad, tile)
        tk = _pick_tile(n_pad, tile)
        xw1 = project(x_p, w1_p, tm=tm)
        h = aggregate(a_p, xw1, b1_p, apply_relu=True, tm=tm, tk=tk)
        xw2 = project(h, w2_p, tm=tm)
        out_p = aggregate(a_p, xw2, b2_p, apply_relu=False, tm=tm, tk=tk)

    return out_p[:n, :f_out]


def gcn_encoder_reference(x, edge_index, params):
    """Plain-JAX reference for correctness checking."""
    a_hat = build_normalized_adjacency(edge_index, x.shape[0])
    h = a_hat @ (x @ params["w1"]) + params["b1"]
    h = jnp.maximum(h, 0.0)
    return a_hat @ (h @ params["w2"]) + params["b2"]


# --------------------------------- main --------------------------------------

if __name__ == "__main__":
    num_nodes = 16
    in_channels = 8
    hidden_channels = 32
    out_channels = 16
    num_edges = 40

    key = jax.random.PRNGKey(0)
    k_x, k_src, k_dst, k_w1, k_w2, k_b1, k_b2 = jax.random.split(key, 7)

    x = jax.random.normal(k_x, (num_nodes, in_channels), jnp.float32)
    edge_index = jnp.stack([
        jax.random.randint(k_src, (num_edges,), 0, num_nodes),
        jax.random.randint(k_dst, (num_edges,), 0, num_nodes),
    ]).astype(jnp.int32)

    params = {
        "w1": glorot(k_w1, (in_channels, hidden_channels)),
        "b1": 0.1 * jax.random.normal(k_b1, (hidden_channels,), jnp.float32),
        "w2": glorot(k_w2, (hidden_channels, out_channels)),
        "b2": 0.1 * jax.random.normal(k_b2, (out_channels,), jnp.float32),
    }

    ref = jax.block_until_ready(gcn_encoder_reference(x, edge_index, params))

    # Small-graph fused path (what this problem size actually uses).
    out_fused = jax.block_until_ready(
        gcn_encoder_forward(x, edge_index, params))
    # Scalable tiled path (projection + K-tiled aggregation), exercised too.
    out_tiled = jax.block_until_ready(
        gcn_encoder_forward(x, edge_index, params, force_tiled=True))

    assert out_fused.shape == (num_nodes, out_channels)
    assert out_tiled.shape == (num_nodes, out_channels)
    assert jnp.allclose(out_fused, ref, rtol=1e-3, atol=1e-3)
    assert jnp.allclose(out_tiled, ref, rtol=1e-3, atol=1e-3)
    print("KERNEL_OK")
</pallas_src>

<mosaic_0001>
module attributes {stable_mosaic.version = 11 : i64} {
  func.func @fused_small_kernel(%arg0: i32, %arg1: memref<128x128xf32, #tpu.memory_space<vmem>>, %arg2: memref<128x128xf32, #tpu.memory_space<vmem>>, %arg3: memref<128x128xf32, #tpu.memory_space<vmem>>, %arg4: memref<1x128xf32, #tpu.memory_space<vmem>>, %arg5: memref<128x128xf32, #tpu.memory_space<vmem>>, %arg6: memref<1x128xf32, #tpu.memory_space<vmem>>, %arg7: memref<128x128xf32, #tpu.memory_space<vmem>>) attributes {dimension_semantics = [#tpu.dimension_semantics<arbitrary>], iteration_bounds = array<i64: 1>, scalar_prefetch = 0 : i64, scratch_operands = 0 : i64, tpu.core_type = #tpu.core_type<tc>, window_params = [{pipeline_mode = #tpu.pipeline_mode<synchronous>, transform_indices = @transform_0, window_bounds = array<i64: 128, 128>}, {pipeline_mode = #tpu.pipeline_mode<synchronous>, transform_indices = @transform_1, window_bounds = array<i64: 128, 128>}, {pipeline_mode = #tpu.pipeline_mode<synchronous>, transform_indices = @transform_2, window_bounds = array<i64: 128, 128>}, {pipeline_mode = #tpu.pipeline_mode<synchronous>, transform_indices = @transform_3, window_bounds = array<i64: 1, 128>}, {pipeline_mode = #tpu.pipeline_mode<synchronous>, transform_indices = @transform_4, window_bounds = array<i64: 128, 128>}, {pipeline_mode = #tpu.pipeline_mode<synchronous>, transform_indices = @transform_5, window_bounds = array<i64: 1, 128>}, {pipeline_mode = #tpu.pipeline_mode<synchronous>, transform_indices = @transform_6, window_bounds = array<i64: 128, 128>}]} {
    %c0 = arith.constant 0 : index
    %c0_0 = arith.constant 0 : index
    %0 = vector.load %arg1[%c0, %c0_0] : memref<128x128xf32, #tpu.memory_space<vmem>>, vector<128x128xf32>
    %c0_1 = arith.constant 0 : index
    %c0_2 = arith.constant 0 : index
    %1 = vector.load %arg2[%c0_1, %c0_2] : memref<128x128xf32, #tpu.memory_space<vmem>>, vector<128x128xf32>
    %c0_3 = arith.constant 0 : index
    %c0_4 = arith.constant 0 : index
    %2 = vector.load %arg3[%c0_3, %c0_4] : memref<128x128xf32, #tpu.memory_space<vmem>>, vector<128x128xf32>
    %cst = arith.constant dense<0.000000e+00> : vector<128x128xf32>
    %3 = tpu.matmul %1, %2, %cst {dimension_numbers = #tpu.dot_dimension_numbers<[1], [0], [0], [1], [0, 0, 1, 1], [], []>} : vector<128x128xf32>, vector<128x128xf32>, vector<128x128xf32> -> vector<128x128xf32>
    %cst_5 = arith.constant dense<0.000000e+00> : vector<128x128xf32>
    %4 = tpu.matmul %0, %3, %cst_5 {dimension_numbers = #tpu.dot_dimension_numbers<[1], [0], [0], [1], [0, 0, 1, 1], [], []>} : vector<128x128xf32>, vector<128x128xf32>, vector<128x128xf32> -> vector<128x128xf32>
    %c0_6 = arith.constant 0 : index
    %c0_7 = arith.constant 0 : index
    %5 = vector.load %arg4[%c0_6, %c0_7] : memref<1x128xf32, #tpu.memory_space<vmem>>, vector<1x128xf32>
    %6 = vector.broadcast %5 : vector<1x128xf32> to vector<128x128xf32>
    %7 = arith.addf %4, %6 : vector<128x128xf32>
    %cst_8 = arith.constant 0.000000e+00 : f32
    %8 = vector.broadcast %cst_8 : f32 to vector<128x128xf32>
    %9 = arith.maximumf %7, %8 : vector<128x128xf32>
    %c0_9 = arith.constant 0 : index
    %c0_10 = arith.constant 0 : index
    %10 = vector.load %arg5[%c0_9, %c0_10] : memref<128x128xf32, #tpu.memory_space<vmem>>, vector<128x128xf32>
    %cst_11 = arith.constant dense<0.000000e+00> : vector<128x128xf32>
    %11 = tpu.matmul %9, %10, %cst_11 {dimension_numbers = #tpu.dot_dimension_numbers<[1], [0], [0], [1], [0, 0, 1, 1], [], []>} : vector<128x128xf32>, vector<128x128xf32>, vector<128x128xf32> -> vector<128x128xf32>
    %cst_12 = arith.constant dense<0.000000e+00> : vector<128x128xf32>
    %12 = tpu.matmul %0, %11, %cst_12 {dimension_numbers = #tpu.dot_dimension_numbers<[1], [0], [0], [1], [0, 0, 1, 1], [], []>} : vector<128x128xf32>, vector<128x128xf32>, vector<128x128xf32> -> vector<128x128xf32>
    %c0_13 = arith.constant 0 : index
    %c0_14 = arith.constant 0 : index
    %13 = vector.load %arg6[%c0_13, %c0_14] : memref<1x128xf32, #tpu.memory_space<vmem>>, vector<1x128xf32>
    %14 = vector.broadcast %13 : vector<1x128xf32> to vector<128x128xf32>
    %15 = arith.addf %12, %14 : vector<128x128xf32>
    %c0_15 = arith.constant 0 : index
    %c0_16 = arith.constant 0 : index
    %16 = vector.load %arg7[%c0_15, %c0_16] : memref<128x128xf32, #tpu.memory_space<vmem>>, vector<128x128xf32>
    tpu.vector_store %arg7[%c0_15, %c0_16], %15 {strides = array<i32>} : memref<128x128xf32, #tpu.memory_space<vmem>>, vector<128x128xf32>,
    return
  }
  func.func @transform_0(%arg0: i32) -> (i32, i32) {
    %c0_i32 = arith.constant 0 : i32
    %c0_i32_0 = arith.constant 0 : i32
    %c0_i32_1 = arith.constant 0 : i32
    return %c0_i32, %c0_i32_0 : i32, i32
  }
  func.func @transform_1(%arg0: i32) -> (i32, i32) {
    %c0_i32 = arith.constant 0 : i32
    %c0_i32_0 = arith.constant 0 : i32
    %c0_i32_1 = arith.constant 0 : i32
    return %c0_i32, %c0_i32_0 : i32, i32
  }
  func.func @transform_2(%arg0: i32) -> (i32, i32) {
    %c0_i32 = arith.constant 0 : i32
    %c0_i32_0 = arith.constant 0 : i32
    %c0_i32_1 = arith.constant 0 : i32
    return %c0_i32, %c0_i32_0 : i32, i32
  }
  func.func @transform_3(%arg0: i32) -> (i32, i32) {
    %c0_i32 = arith.constant 0 : i32
    %c0_i32_0 = arith.constant 0 : i32
    %c0_i32_1 = arith.constant 0 : i32
    return %c0_i32, %c0_i32_0 : i32, i32
  }
  func.func @transform_4(%arg0: i32) -> (i32, i32) {
    %c0_i32 = arith.constant 0 : i32
    %c0_i32_0 = arith.constant 0 : i32
    %c0_i32_1 = arith.constant 0 : i32
    return %c0_i32, %c0_i32_0 : i32, i32
  }
  func.func @transform_5(%arg0: i32) -> (i32, i32) {
    %c0_i32 = arith.constant 0 : i32
    %c0_i32_0 = arith.constant 0 : i32
    %c0_i32_1 = arith.constant 0 : i32
    return %c0_i32, %c0_i32_0 : i32, i32
  }
  func.func @transform_6(%arg0: i32) -> (i32, i32) {
    %c0_i32 = arith.constant 0 : i32
    %c0_i32_0 = arith.constant 0 : i32
    %c0_i32_1 = arith.constant 0 : i32
    return %c0_i32, %c0_i32_0 : i32, i32
  }
}

</mosaic_0001>

<llo_original>
// kernel: tpu_custom_call.1
$region0: #{tpu_custom_call.1}
  #allocation0 [shape = 'u32[]', space=smem, size = 0x4, offset = 0x4, fixed_abs, tag = 'smem constant byte address 0x4 - core index']
  #allocation1 [shape = 'u32[144,128]{1,0:T(1,128)}', space=vmem, size = 0x12000, scoped, tag = 'internal scratch']
  %s0 = inlined_call_operand.hbm [shape: f32[128,128], index: 0, kind: input, shape index: {}]
  %s1 = inlined_call_operand.hbm [shape: f32[128,128], index: 1, kind: input, shape index: {}]
  %s2 = inlined_call_operand.hbm [shape: f32[128,128], index: 2, kind: input, shape index: {}]
  %s3 = inlined_call_operand.vmem [shape: f32[1,128], index: 3, kind: input, shape index: {}]
  %s4 = inlined_call_operand.hbm [shape: f32[128,128], index: 4, kind: input, shape index: {}]
  %s5 = inlined_call_operand.vmem [shape: f32[1,128], index: 5, kind: input, shape index: {}]
  %s6 = inlined_call_operand.hbm [shape: f32[128,128], index: 6, kind: output, shape index: {}]
  %s7 = sld [smem:[#allocation0]]
  $region50: #{tpu_custom_call.1} parent=0
    _
  %s9 = ssub.s32 1, %s7
  %s10 = scalar_select 0, %s9, %s7
  $region1: #{tpu_custom_call.1} parent=0
    #allocation2 [shape = 'u8[65536]{0}', space=vmem, size = 0x10000, scoped, tag = 'input window, operand 0, single buffered']
    #allocation3 [shape = 's32[1]{0}', space=sflag, size = 0x4, scoped, tag = 'scoped memory for tpu_custom_call.1']
    #allocation4 [shape = 's32[1]{0}', space=sflag, size = 0x4, scoped, tag = 'scoped memory for tpu_custom_call.1']
    #allocation5 [shape = 'u8[65536]{0}', space=vmem, size = 0x10000, scoped, tag = 'input window, operand 1, single buffered']
    #allocation6 [shape = 's32[1]{0}', space=sflag, size = 0x4, scoped, tag = 'scoped memory for tpu_custom_call.1']
    #allocation7 [shape = 'u8[65536]{0}', space=vmem, size = 0x10000, scoped, tag = 'input window, operand 2, single buffered']
    #allocation8 [shape = 'u8[65536]{0}', space=vmem, size = 0x10000, scoped, tag = 'input window, operand 4, single buffered']
    #allocation9 [shape = 's32[1]{0}', space=sflag, size = 0x4, scoped, tag = 'scoped memory for tpu_custom_call.1']
    #allocation10 [shape = 'u8[65536]{0}', space=vmem, size = 0x10000, scoped, tag = 'output window, operand 0, single buffered']
    %11 = vsyncpa [#allocation3], 0
    %12 = vsyncpa [#allocation6], 0
    %13 = vsyncpa [#allocation9], 0
    %14 = vsyncpa [#allocation4], 0
    // Predicated region
    $region2: #{tpu_custom_call.1} parent=1 // pred_check
      _
    $region3: #{tpu_custom_call.1} parent=1 // pred_check_branch
      %16 = sbr.rel (0) target = $region5
    $region4: #{tpu_custom_call.1} parent=1 // pred_region
      %s18 = ssub.s32 2048, 2048
      %19 = vsyncadd [#allocation3], %s18
      %s20 = sshll.u32 [#allocation2], 4
      %s21 = int_to_ptr.vmem [resolvable:$true] %s20
      %26 = dma.hbm_to_vmem [thread:$0]  %s0, 2048, %s21, [#allocation3], 128, 128, 8
    $region5: #{tpu_custom_call.1} parent=1 // pred_fallthru
      _
    // Predicated region
    $region6: #{tpu_custom_call.1} parent=1 // pred_check
      _
    $region7: #{tpu_custom_call.1} parent=1 // pred_check_branch
      %28 = sbr.rel (0) target = $region9
    $region8: #{tpu_custom_call.1} parent=1 // pred_region
      %s30 = ssub.s32 2048, 2048
      %31 = vsyncadd [#allocation6], %s30
      %s32 = sshll.u32 [#allocation5], 4
      %s33 = int_to_ptr.vmem [resolvable:$true] %s32
      %38 = dma.hbm_to_vmem [thread:$0]  %s1, 2048, %s33, [#allocation6], 128, 128, 8
    $region9: #{tpu_custom_call.1} parent=1 // pred_fallthru
      _
    // Predicated region
    $region10: #{tpu_custom_call.1} parent=1 // pred_check
      _
    $region11: #{tpu_custom_call.1} parent=1 // pred_check_branch
      %40 = sbr.rel (0) target = $region13
    $region12: #{tpu_custom_call.1} parent=1 // pred_region
      %s42 = ssub.s32 2048, 2048
      %43 = vsyncadd [#allocation6], %s42
      %s44 = sshll.u32 [#allocation7], 4
      %s45 = int_to_ptr.vmem [resolvable:$true] %s44
      %50 = dma.hbm_to_vmem [thread:$0]  %s2, 2048, %s45, [#allocation6], 128, 128, 8
    $region13: #{tpu_custom_call.1} parent=1 // pred_fallthru
      _
    // Predicated region
    $region14: #{tpu_custom_call.1} parent=1 // pred_check
      _
    $region15: #{tpu_custom_call.1} parent=1 // pred_check_branch
      %52 = sbr.rel (0) target = $region17
    $region16: #{tpu_custom_call.1} parent=1 // pred_region
      _
    $region17: #{tpu_custom_call.1} parent=1 // pred_fallthru
      _
    // Predicated region
    $region18: #{tpu_custom_call.1} parent=1 // pred_check
      _
    $region19: #{tpu_custom_call.1} parent=1 // pred_check_branch
      %54 = sbr.rel (0) target = $region21
    $region20: #{tpu_custom_call.1} parent=1 // pred_region
      %s56 = ssub.s32 2048, 2048
      %57 = vsyncadd [#allocation9], %s56
      %s58 = sshll.u32 [#allocation8], 4
      %s59 = int_to_ptr.vmem [resolvable:$true] %s58
      %64 = dma.hbm_to_vmem [thread:$0]  %s4, 2048, %s59, [#allocation9], 128, 128, 8
    $region21: #{tpu_custom_call.1} parent=1 // pred_fallthru
      _
    // Predicated region
    $region22: #{tpu_custom_call.1} parent=1 // pred_check
      _
    $region23: #{tpu_custom_call.1} parent=1 // pred_check_branch
      %66 = sbr.rel (0) target = $region25
    $region24: #{tpu_custom_call.1} parent=1 // pred_region
      _
    $region25: #{tpu_custom_call.1} parent=1 // pred_fallthru
      _
    // Predicated region
    $region26: #{tpu_custom_call.1} parent=1 // pred_check
      _
    $region27: #{tpu_custom_call.1} parent=1 // pred_check_branch
      %68 = sbr.rel (0) target = $region29
    $region28: #{tpu_custom_call.1} parent=1 // pred_region
      %69 = dma.done [#allocation3], 2048
    $region29: #{tpu_custom_call.1} parent=1 // pred_fallthru
      _
    // Predicated region
    $region30: #{tpu_custom_call.1} parent=1 // pred_check
      _
    $region31: #{tpu_custom_call.1} parent=1 // pred_check_branch
      %71 = sbr.rel (0) target = $region33
    $region32: #{tpu_custom_call.1} parent=1 // pred_region
      %72 = dma.done [#allocation6], 2048
    $region33: #{tpu_custom_call.1} parent=1 // pred_fallthru
      _
    // Predicated region
    $region34: #{tpu_custom_call.1} parent=1 // pred_check
      _
    $region35: #{tpu_custom_call.1} parent=1 // pred_check_branch
      %74 = sbr.rel (0) target = $region37
    $region36: #{tpu_custom_call.1} parent=1 // pred_region
      %75 = dma.done [#allocation6], 2048
    $region37: #{tpu_custom_call.1} parent=1 // pred_fallthru
      _
    // Predicated region
    $region38: #{tpu_custom_call.1} parent=1 // pred_check
      _
    $region39: #{tpu_custom_call.1} parent=1 // pred_check_branch
      %77 = sbr.rel (0) target = $region41
    $region40: #{tpu_custom_call.1} parent=1 // pred_region
      %78 = dma.done [#allocation9], 2048
    $region41: #{tpu_custom_call.1} parent=1 // pred_fallthru
      _
    %v79 = vld [vmem:[#allocation2] sm:$0xff]
    %v80 = vld [vmem:[#allocation2 + $0x8] sm:$0xff]
    %v81 = vld [vmem:[#allocation2 + $0x10] sm:$0xff]
    %v82 = vld [vmem:[#allocation2 + $0x18] sm:$0xff]
    %v83 = vld [vmem:[#allocation2 + $0x20] sm:$0xff]
    %v84 = vld [vmem:[#allocation2 + $0x28] sm:$0xff]
    %v85 = vld [vmem:[#allocation2 + $0x30] sm:$0xff]
    %v86 = vld [vmem:[#allocation2 + $0x38] sm:$0xff]
    %v87 = vld [vmem:[#allocation2 + $0x40] sm:$0xff]
    %v88 = vld [vmem:[#allocation2 + $0x48] sm:$0xff]
    %v89 = vld [vmem:[#allocation2 + $0x50] sm:$0xff]
    %v90 = vld [vmem:[#allocation2 + $0x58] sm:$0xff]
    %v91 = vld [vmem:[#allocation2 + $0x60] sm:$0xff]
    %v92 = vld [vmem:[#allocation2 + $0x68] sm:$0xff]
    %v93 = vld [vmem:[#allocation2 + $0x70] sm:$0xff]
    %v94 = vld [vmem:[#allocation2 + $0x78] sm:$0xff]
    %v95 = vld [vmem:[#allocation5] sm:$0xff]
    %v96 = vld [vmem:[#allocation5 + $0x8] sm:$0xff]
    %v97 = vld [vmem:[#allocation5 + $0x10] sm:$0xff]
    %v98 = vld [vmem:[#allocation5 + $0x18] sm:$0xff]
    %v99 = vld [vmem:[#allocation5 + $0x20] sm:$0xff]
    %v100 = vld [vmem:[#allocation5 + $0x28] sm:$0xff]
    %v101 = vld [vmem:[#allocation5 + $0x30] sm:$0xff]
    %v102 = vld [vmem:[#allocation5 + $0x38] sm:$0xff]
    %v103 = vld [vmem:[#allocation5 + $0x40] sm:$0xff]
    %v104 = vld [vmem:[#allocation5 + $0x48] sm:$0xff]
    %v105 = vld [vmem:[#allocation5 + $0x50] sm:$0xff]
    %v106 = vld [vmem:[#allocation5 + $0x58] sm:$0xff]
    %v107 = vld [vmem:[#allocation5 + $0x60] sm:$0xff]
    %v108 = vld [vmem:[#allocation5 + $0x68] sm:$0xff]
    %v109 = vld [vmem:[#allocation5 + $0x70] sm:$0xff]
    %v110 = vld [vmem:[#allocation5 + $0x78] sm:$0xff]
    %v111 = vld [vmem:[#allocation7] sm:$0xff]
    %v112 = vld [vmem:[#allocation7 + $0x8] sm:$0xff]
    %v113 = vld [vmem:[#allocation7 + $0x10] sm:$0xff]
    %v114 = vld [vmem:[#allocation7 + $0x18] sm:$0xff]
    %v115 = vld [vmem:[#allocation7 + $0x20] sm:$0xff]
    %v116 = vld [vmem:[#allocation7 + $0x28] sm:$0xff]
    %v117 = vld [vmem:[#allocation7 + $0x30] sm:$0xff]
    %v118 = vld [vmem:[#allocation7 + $0x38] sm:$0xff]
    %v119 = vld [vmem:[#allocation7 + $0x40] sm:$0xff]
    %v120 = vld [vmem:[#allocation7 + $0x48] sm:$0xff]
    %v121 = vld [vmem:[#allocation7 + $0x50] sm:$0xff]
    %v122 = vld [vmem:[#allocation7 + $0x58] sm:$0xff]
    %v123 = vld [vmem:[#allocation7 + $0x60] sm:$0xff]
    %v124 = vld [vmem:[#allocation7 + $0x68] sm:$0xff]
    %v125 = vld [vmem:[#allocation7 + $0x70] sm:$0xff]
    %v126 = vld [vmem:[#allocation7 + $0x78] sm:$0xff]
    %127 = vmatprep.subr.mxu0 0.0
    %128 = vmatpush1.msra.mxu0 %v126
    %129 = vmatprep.subr.mxu0 0.0
    %130 = vmatpush1.msra.mxu0 %v125
    %131 = vmatprep.subr.mxu0 0.0
    %132 = vmatpush1.msra.mxu0 %v124
    %133 = vmatprep.subr.mxu0 0.0
    %134 = vmatpush1.msra.mxu0 %v123
    %135 = vmatprep.subr.mxu0 0.0
    %136 = vmatpush1.msra.mxu0 %v122
    %137 = vmatprep.subr.mxu0 0.0
    %138 = vmatpush1.msra.mxu0 %v121
    %139 = vmatprep.subr.mxu0 0.0
    %140 = vmatpush1.msra.mxu0 %v120
    %141 = vmatprep.subr.mxu0 0.0
    %142 = vmatpush1.msra.mxu0 %v119
    %143 = vmatprep.subr.mxu0 0.0
    %144 = vmatpush1.msra.mxu0 %v118
    %145 = vmatprep.subr.mxu0 0.0
    %146 = vmatpush1.msra.mxu0 %v117
    %147 = vmatprep.subr.mxu0 0.0
    %148 = vmatpush1.msra.mxu0 %v116
    %149 = vmatprep.subr.mxu0 0.0
    %150 = vmatpush1.msra.mxu0 %v115
    %151 = vmatprep.subr.mxu0 0.0
    %152 = vmatpush1.msra.mxu0 %v114
    %153 = vmatprep.subr.mxu0 0.0
    %154 = vmatpush1.msra.mxu0 %v113
    %155 = vmatprep.subr.mxu0 0.0
    %156 = vmatpush1.msra.mxu0 %v112
    %157 = vmatprep.subr.mxu0 0.0
    %158 = vmatpush1.msra.mxu0 %v111
    %159 = vmatprep.subr.mxu0 0.0
    %160 = vmatpush2.msra.mxu0 0.0
    %161 = vmatprep.subr.mxu0 0.0
    %162 = vmatpush2.msra.mxu0 0.0
    %163 = vmatprep.subr.mxu0 0.0
    %164 = vmatpush2.msra.mxu0 0.0
    %165 = vmatprep.subr.mxu0 0.0
    %166 = vmatpush2.msra.mxu0 0.0
    %167 = vmatprep.subr.mxu0 0.0
    %168 = vmatpush2.msra.mxu0 0.0
    %169 = vmatprep.subr.mxu0 0.0
    %170 = vmatpush2.msra.mxu0 0.0
    %171 = vmatprep.subr.mxu0 0.0
    %172 = vmatpush2.msra.mxu0 0.0
    %173 = vmatprep.subr.mxu0 0.0
    %174 = vmatpush2.msra.mxu0 0.0
    %175 = vmatprep.subr.mxu0 0.0
    %176 = vmatpush2.msra.mxu0 0.0
    %177 = vmatprep.subr.mxu0 0.0
    %178 = vmatpush2.msra.mxu0 0.0
    %179 = vmatprep.subr.mxu0 0.0
    %180 = vmatpush2.msra.mxu0 0.0
    %181 = vmatprep.subr.mxu0 0.0
    %182 = vmatpush2.msra.mxu0 0.0
    %183 = vmatprep.subr.mxu0 0.0
    %184 = vmatpush2.msra.mxu0 0.0
    %185 = vmatprep.subr.mxu0 0.0
    %186 = vmatpush2.msra.mxu0 0.0
    %187 = vmatprep.subr.mxu0 0.0
    %188 = vmatpush2.msra.mxu0 0.0
    %189 = vmatprep.subr.mxu0 0.0
    %190 = vmatpush2.msra.mxu0 0.0
    %191 = vmatprep.mubr.f32.mxu0 0.0
    %192 = vmatmul.mubr.f32.gmra.mxu0 %v95
    %v193 = vpop.f32.mrf.mxu0
    %v194 = vadd.f32 0.0, %v193
    %v195 = vpop.f32.mrf.mxu0
    %196 = vmatprep.mubr.f32.mxu0 0.0
    %197 = vmatmul.mubr.f32.gmra.mxu0 %v96
    %v198 = vpop.f32.mrf.mxu0
    %v199 = vadd.f32 0.0, %v198
    %v200 = vpop.f32.mrf.mxu0
    %201 = vmatprep.mubr.f32.mxu0 0.0
    %202 = vmatmul.mubr.f32.gmra.mxu0 %v97
    %v203 = vpop.f32.mrf.mxu0
    %v204 = vadd.f32 0.0, %v203
    %v205 = vpop.f32.mrf.mxu0
    %206 = vmatprep.mubr.f32.mxu0 0.0
    %207 = vmatmul.mubr.f32.gmra.mxu0 %v98
    %v208 = vpop.f32.mrf.mxu0
    %v209 = vadd.f32 0.0, %v208
    %v210 = vpop.f32.mrf.mxu0
    %211 = vmatprep.mubr.f32.mxu0 0.0
    %212 = vmatmul.mubr.f32.gmra.mxu0 %v99
    %v213 = vpop.f32.mrf.mxu0
    %v214 = vadd.f32 0.0, %v213
    %v215 = vpop.f32.mrf.mxu0
    %216 = vmatprep.mubr.f32.mxu0 0.0
    %217 = vmatmul.mubr.f32.gmra.mxu0 %v100
    %v218 = vpop.f32.mrf.mxu0
    %v219 = vadd.f32 0.0, %v218
    %v220 = vpop.f32.mrf.mxu0
    %221 = vmatprep.mubr.f32.mxu0 0.0
    %222 = vmatmul.mubr.f32.gmra.mxu0 %v101
    %v223 = vpop.f32.mrf.mxu0
    %v224 = vadd.f32 0.0, %v223
    %v225 = vpop.f32.mrf.mxu0
    %226 = vmatprep.mubr.f32.mxu0 0.0
    %227 = vmatmul.mubr.f32.gmra.mxu0 %v102
    %v228 = vpop.f32.mrf.mxu0
    %v229 = vadd.f32 0.0, %v228
    %v230 = vpop.f32.mrf.mxu0
    %231 = vmatprep.mubr.f32.mxu0 0.0
    %232 = vmatmul.mubr.f32.gmra.mxu0 %v103
    %v233 = vpop.f32.mrf.mxu0
    %v234 = vadd.f32 0.0, %v233
    %v235 = vpop.f32.mrf.mxu0
    %236 = vmatprep.mubr.f32.mxu0 0.0
    %237 = vmatmul.mubr.f32.gmra.mxu0 %v104
    %v238 = vpop.f32.mrf.mxu0
    %v239 = vadd.f32 0.0, %v238
    %v240 = vpop.f32.mrf.mxu0
    %241 = vmatprep.mubr.f32.mxu0 0.0
    %242 = vmatmul.mubr.f32.gmra.mxu0 %v105
    %v243 = vpop.f32.mrf.mxu0
    %v244 = vadd.f32 0.0, %v243
    %v245 = vpop.f32.mrf.mxu0
    %246 = vmatprep.mubr.f32.mxu0 0.0
    %247 = vmatmul.mubr.f32.gmra.mxu0 %v106
    %v248 = vpop.f32.mrf.mxu0
    %v249 = vadd.f32 0.0, %v248
    %v250 = vpop.f32.mrf.mxu0
    %251 = vmatprep.mubr.f32.mxu0 0.0
    %252 = vmatmul.mubr.f32.gmra.mxu0 %v107
    %v253 = vpop.f32.mrf.mxu0
    %v254 = vadd.f32 0.0, %v253
    %v255 = vpop.f32.mrf.mxu0
    %256 = vmatprep.mubr.f32.mxu0 0.0
    %257 = vmatmul.mubr.f32.gmra.mxu0 %v108
    %v258 = vpop.f32.mrf.mxu0
    %v259 = vadd.f32 0.0, %v258
    %v260 = vpop.f32.mrf.mxu0
    %261 = vmatprep.mubr.f32.mxu0 0.0
    %262 = vmatmul.mubr.f32.gmra.mxu0 %v109
    %v263 = vpop.f32.mrf.mxu0
    %v264 = vadd.f32 0.0, %v263
    %v265 = vpop.f32.mrf.mxu0
    %266 = vmatprep.mubr.f32.mxu0 0.0
    %267 = vmatmul.mubr.f32.gmra.mxu0 %v110
    %v268 = vpop.f32.mrf.mxu0
    %v269 = vadd.f32 0.0, %v268
    %v270 = vpop.f32.mrf.mxu0
    %271 = vdwg.mxu0
    %v272 = vld [vmem:[%s3] sm:$0x1]
    %v274 = vlaneseq
    %v275 = vshrl.u32 %v274, 7
    %v276 = vsub.s32 0, %v275
    %v277 = vrot.slane %v272, %v276
    %279 = vmatprep.subr.mxu0 0.0
    %280 = vmatpush1.msra.mxu0 %v269
    %281 = vmatprep.subr.mxu0 0.0
    %282 = vmatpush1.msra.mxu0 %v264
    %283 = vmatprep.subr.mxu0 0.0
    %284 = vmatpush1.msra.mxu0 %v259
    %285 = vmatprep.subr.mxu0 0.0
    %286 = vmatpush1.msra.mxu0 %v254
    %287 = vmatprep.subr.mxu0 0.0
    %288 = vmatpush1.msra.mxu0 %v249
    %289 = vmatprep.subr.mxu0 0.0
    %290 = vmatpush1.msra.mxu0 %v244
    %291 = vmatprep.subr.mxu0 0.0
    %292 = vmatpush1.msra.mxu0 %v239
    %293 = vmatprep.subr.mxu0 0.0
    %294 = vmatpush1.msra.mxu0 %v234
    %295 = vmatprep.subr.mxu0 0.0
    %296 = vmatpush1.msra.mxu0 %v229
    %297 = vmatprep.subr.mxu0 0.0
    %298 = vmatpush1.msra.mxu0 %v224
    %299 = vmatprep.subr.mxu0 0.0
    %300 = vmatpush1.msra.mxu0 %v219
    %301 = vmatprep.subr.mxu0 0.0
    %302 = vmatpush1.msra.mxu0 %v214
    %303 = vmatprep.subr.mxu0 0.0
    %304 = vmatpush1.msra.mxu0 %v209
    %305 = vmatprep.subr.mxu0 0.0
    %306 = vmatpush1.msra.mxu0 %v204
    %307 = vmatprep.subr.mxu0 0.0
    %308 = vmatpush1.msra.mxu0 %v199
    %309 = vmatprep.subr.mxu0 0.0
    %310 = vmatpush1.msra.mxu0 %v194
    %311 = vmatprep.subr.mxu0 0.0
    %312 = vmatpush2.msra.mxu0 0.0
    %313 = vmatprep.subr.mxu0 0.0
    %314 = vmatpush2.msra.mxu0 0.0
    %315 = vmatprep.subr.mxu0 0.0
    %316 = vmatpush2.msra.mxu0 0.0
    %317 = vmatprep.subr.mxu0 0.0
    %318 = vmatpush2.msra.mxu0 0.0
    %319 = vmatprep.subr.mxu0 0.0
    %320 = vmatpush2.msra.mxu0 0.0
    %321 = vmatprep.subr.mxu0 0.0
    %322 = vmatpush2.msra.mxu0 0.0
    %323 = vmatprep.subr.mxu0 0.0
    %324 = vmatpush2.msra.mxu0 0.0
    %325 = vmatprep.subr.mxu0 0.0
    %326 = vmatpush2.msra.mxu0 0.0
    %327 = vmatprep.subr.mxu0 0.0
    %328 = vmatpush2.msra.mxu0 0.0
    %329 = vmatprep.subr.mxu0 0.0
    %330 = vmatpush2.msra.mxu0 0.0
    %331 = vmatprep.subr.mxu0 0.0
    %332 = vmatpush2.msra.mxu0 0.0
    %333 = vmatprep.subr.mxu0 0.0
    %334 = vmatpush2.msra.mxu0 0.0
    %335 = vmatprep.subr.mxu0 0.0
    %336 = vmatpush2.msra.mxu0 0.0
    %337 = vmatprep.subr.mxu0 0.0
    %338 = vmatpush2.msra.mxu0 0.0
    %339 = vmatprep.subr.mxu0 0.0
    %340 = vmatpush2.msra.mxu0 0.0
    %341 = vmatprep.subr.mxu0 0.0
    %342 = vmatpush2.msra.mxu0 0.0
    %343 = vmatprep.mubr.f32.mxu0 0.0
    %344 = vmatmul.mubr.f32.gmra.mxu0 %v79
    %v345 = vpop.f32.mrf.mxu0
    %v346 = vadd.f32 %v277, %v345
    %v347 = vpop.f32.mrf.mxu0
    %348 = vmatprep.mubr.f32.mxu0 0.0
    %349 = vmatmul.mubr.f32.gmra.mxu0 %v80
    %v350 = vpop.f32.mrf.mxu0
    %v351 = vadd.f32 %v277, %v350
    %v352 = vpop.f32.mrf.mxu0
    %353 = vmatprep.mubr.f32.mxu0 0.0
    %354 = vmatmul.mubr.f32.gmra.mxu0 %v81
    %v355 = vpop.f32.mrf.mxu0
    %v356 = vadd.f32 %v277, %v355
    %v357 = vpop.f32.mrf.mxu0
    %358 = vmatprep.mubr.f32.mxu0 0.0
    %359 = vmatmul.mubr.f32.gmra.mxu0 %v82
    %v360 = vpop.f32.mrf.mxu0
    %v361 = vadd.f32 %v277, %v360
    %v362 = vpop.f32.mrf.mxu0
    %363 = vmatprep.mubr.f32.mxu0 0.0
    %364 = vmatmul.mubr.f32.gmra.mxu0 %v83
    %v365 = vpop.f32.mrf.mxu0
    %v366 = vadd.f32 %v277, %v365
    %v367 = vpop.f32.mrf.mxu0
    %368 = vmatprep.mubr.f32.mxu0 0.0
    %369 = vmatmul.mubr.f32.gmra.mxu0 %v84
    %v370 = vpop.f32.mrf.mxu0
    %v371 = vadd.f32 %v277, %v370
    %v372 = vpop.f32.mrf.mxu0
    %373 = vmatprep.mubr.f32.mxu0 0.0
    %374 = vmatmul.mubr.f32.gmra.mxu0 %v85
    %v375 = vpop.f32.mrf.mxu0
    %v376 = vadd.f32 %v277, %v375
    %v377 = vpop.f32.mrf.mxu0
    %378 = vmatprep.mubr.f32.mxu0 0.0
    %379 = vmatmul.mubr.f32.gmra.mxu0 %v86
    %v380 = vpop.f32.mrf.mxu0
    %v381 = vadd.f32 %v277, %v380
    %v382 = vpop.f32.mrf.mxu0
    %383 = vmatprep.mubr.f32.mxu0 0.0
    %384 = vmatmul.mubr.f32.gmra.mxu0 %v87
    %v385 = vpop.f32.mrf.mxu0
    %v386 = vadd.f32 %v277, %v385
    %v387 = vpop.f32.mrf.mxu0
    %388 = vmatprep.mubr.f32.mxu0 0.0
    %389 = vmatmul.mubr.f32.gmra.mxu0 %v88
    %v390 = vpop.f32.mrf.mxu0
    %v391 = vadd.f32 %v277, %v390
    %v392 = vpop.f32.mrf.mxu0
    %393 = vmatprep.mubr.f32.mxu0 0.0
    %394 = vmatmul.mubr.f32.gmra.mxu0 %v89
    %v395 = vpop.f32.mrf.mxu0
    %v396 = vadd.f32 %v277, %v395
    %v397 = vpop.f32.mrf.mxu0
    %398 = vmatprep.mubr.f32.mxu0 0.0
    %399 = vmatmul.mubr.f32.gmra.mxu0 %v90
    %v400 = vpop.f32.mrf.mxu0
    %v401 = vadd.f32 %v277, %v400
    %v402 = vpop.f32.mrf.mxu0
    %403 = vmatprep.mubr.f32.mxu0 0.0
    %404 = vmatmul.mubr.f32.gmra.mxu0 %v91
    %v405 = vpop.f32.mrf.mxu0
    %v406 = vadd.f32 %v277, %v405
    %v407 = vpop.f32.mrf.mxu0
    %408 = vmatprep.mubr.f32.mxu0 0.0
    %409 = vmatmul.mubr.f32.gmra.mxu0 %v92
    %v410 = vpop.f32.mrf.mxu0
    %v411 = vadd.f32 %v277, %v410
    %v412 = vpop.f32.mrf.mxu0
    %413 = vmatprep.mubr.f32.mxu0 0.0
    %414 = vmatmul.mubr.f32.gmra.mxu0 %v93
    %v415 = vpop.f32.mrf.mxu0
    %v416 = vadd.f32 %v277, %v415
    %v417 = vpop.f32.mrf.mxu0
    %418 = vmatprep.mubr.f32.mxu0 0.0
    %419 = vmatmul.mubr.f32.gmra.mxu0 %v94
    %v420 = vpop.f32.mrf.mxu0
    %v421 = vadd.f32 %v277, %v420
    %v422 = vpop.f32.mrf.mxu0
    %423 = vdwg.mxu0
    %v424 = vmax.f32 %v346, 0.0
    %v425 = vmax.f32 %v351, 0.0
    %v426 = vmax.f32 %v356, 0.0
    %v427 = vmax.f32 %v361, 0.0
    %v428 = vmax.f32 %v366, 0.0
    %v429 = vmax.f32 %v371, 0.0
    %v430 = vmax.f32 %v376, 0.0
    %v431 = vmax.f32 %v381, 0.0
    %v432 = vmax.f32 %v386, 0.0
    %v433 = vmax.f32 %v391, 0.0
    %v434 = vmax.f32 %v396, 0.0
    %v435 = vmax.f32 %v401, 0.0
    %v436 = vmax.f32 %v406, 0.0
    %v437 = vmax.f32 %v411, 0.0
    %v438 = vmax.f32 %v416, 0.0
    %v439 = vmax.f32 %v421, 0.0
    %v440 = vld [vmem:[#allocation8] sm:$0xff]
    %v441 = vld [vmem:[#allocation8 + $0x8] sm:$0xff]
    %v442 = vld [vmem:[#allocation8 + $0x10] sm:$0xff]
    %v443 = vld [vmem:[#allocation8 + $0x18] sm:$0xff]
    %v444 = vld [vmem:[#allocation8 + $0x20] sm:$0xff]
    %v445 = vld [vmem:[#allocation8 + $0x28] sm:$0xff]
    %v446 = vld [vmem:[#allocation8 + $0x30] sm:$0xff]
    %v447 = vld [vmem:[#allocation8 + $0x38] sm:$0xff]
    %v448 = vld [vmem:[#allocation8 + $0x40] sm:$0xff]
    %v449 = vld [vmem:[#allocation8 + $0x48] sm:$0xff]
    %v450 = vld [vmem:[#allocation8 + $0x50] sm:$0xff]
    %v451 = vld [vmem:[#allocation8 + $0x58] sm:$0xff]
    %v452 = vld [vmem:[#allocation8 + $0x60] sm:$0xff]
    %v453 = vld [vmem:[#allocation8 + $0x68] sm:$0xff]
    %v454 = vld [vmem:[#allocation8 + $0x70] sm:$0xff]
    %v455 = vld [vmem:[#allocation8 + $0x78] sm:$0xff]
    %456 = vmatprep.subr.mxu0 0.0
    %457 = vmatpush1.msra.mxu0 %v455
    %458 = vmatprep.subr.mxu0 0.0
    %459 = vmatpush1.msra.mxu0 %v454
    %460 = vmatprep.subr.mxu0 0.0
    %461 = vmatpush1.msra.mxu0 %v453
    %462 = vmatprep.subr.mxu0 0.0
    %463 = vmatpush1.msra.mxu0 %v452
    %464 = vmatprep.subr.mxu0 0.0
    %465 = vmatpush1.msra.mxu0 %v451
    %466 = vmatprep.subr.mxu0 0.0
    %467 = vmatpush1.msra.mxu0 %v450
    %468 = vmatprep.subr.mxu0 0.0
    %469 = vmatpush1.msra.mxu0 %v449
    %470 = vmatprep.subr.mxu0 0.0
    %471 = vmatpush1.msra.mxu0 %v448
    %472 = vmatprep.subr.mxu0 0.0
    %473 = vmatpush1.msra.mxu0 %v447
    %474 = vmatprep.subr.mxu0 0.0
    %475 = vmatpush1.msra.mxu0 %v446
    %476 = vmatprep.subr.mxu0 0.0
    %477 = vmatpush1.msra.mxu0 %v445
    %478 = vmatprep.subr.mxu0 0.0
    %479 = vmatpush1.msra.mxu0 %v444
    %480 = vmatprep.subr.mxu0 0.0
    %481 = vmatpush1.msra.mxu0 %v443
    %482 = vmatprep.subr.mxu0 0.0
    %483 = vmatpush1.msra.mxu0 %v442
    %484 = vmatprep.subr.mxu0 0.0
    %485 = vmatpush1.msra.mxu0 %v441
    %486 = vmatprep.subr.mxu0 0.0
    %487 = vmatpush1.msra.mxu0 %v440
    %488 = vmatprep.subr.mxu0 0.0
    %489 = vmatpush2.msra.mxu0 0.0
    %490 = vmatprep.subr.mxu0 0.0
    %491 = vmatpush2.msra.mxu0 0.0
    %492 = vmatprep.subr.mxu0 0.0
    %493 = vmatpush2.msra.mxu0 0.0
    %494 = vmatprep.subr.mxu0 0.0
    %495 = vmatpush2.msra.mxu0 0.0
    %496 = vmatprep.subr.mxu0 0.0
    %497 = vmatpush2.msra.mxu0 0.0
    %498 = vmatprep.subr.mxu0 0.0
    %499 = vmatpush2.msra.mxu0 0.0
    %500 = vmatprep.subr.mxu0 0.0
    %501 = vmatpush2.msra.mxu0 0.0
    %502 = vmatprep.subr.mxu0 0.0
    %503 = vmatpush2.msra.mxu0 0.0
    %504 = vmatprep.subr.mxu0 0.0
    %505 = vmatpush2.msra.mxu0 0.0
    %506 = vmatprep.subr.mxu0 0.0
    %507 = vmatpush2.msra.mxu0 0.0
    %508 = vmatprep.subr.mxu0 0.0
    %509 = vmatpush2.msra.mxu0 0.0
    %510 = vmatprep.subr.mxu0 0.0
    %511 = vmatpush2.msra.mxu0 0.0
    %512 = vmatprep.subr.mxu0 0.0
    %513 = vmatpush2.msra.mxu0 0.0
    %514 = vmatprep.subr.mxu0 0.0
    %515 = vmatpush2.msra.mxu0 0.0
    %516 = vmatprep.subr.mxu0 0.0
    %517 = vmatpush2.msra.mxu0 0.0
    %518 = vmatprep.subr.mxu0 0.0
    %519 = vmatpush2.msra.mxu0 0.0
    %520 = vmatprep.mubr.f32.mxu0 0.0
    %521 = vmatmul.mubr.f32.gmra.mxu0 %v424
    %v522 = vpop.f32.mrf.mxu0
    %v523 = vadd.f32 0.0, %v522
    %v524 = vpop.f32.mrf.mxu0
    %525 = vmatprep.mubr.f32.mxu0 0.0
    %526 = vmatmul.mubr.f32.gmra.mxu0 %v425
    %v527 = vpop.f32.mrf.mxu0
    %v528 = vadd.f32 0.0, %v527
    %v529 = vpop.f32.mrf.mxu0
    %530 = vmatprep.mubr.f32.mxu0 0.0
    %531 = vmatmul.mubr.f32.gmra.mxu0 %v426
    %v532 = vpop.f32.mrf.mxu0
    %v533 = vadd.f32 0.0, %v532
    %v534 = vpop.f32.mrf.mxu0
    %535 = vmatprep.mubr.f32.mxu0 0.0
    %536 = vmatmul.mubr.f32.gmra.mxu0 %v427
    %v537 = vpop.f32.mrf.mxu0
    %v538 = vadd.f32 0.0, %v537
    %v539 = vpop.f32.mrf.mxu0
    %540 = vmatprep.mubr.f32.mxu0 0.0
    %541 = vmatmul.mubr.f32.gmra.mxu0 %v428
    %v542 = vpop.f32.mrf.mxu0
    %v543 = vadd.f32 0.0, %v542
    %v544 = vpop.f32.mrf.mxu0
    %545 = vmatprep.mubr.f32.mxu0 0.0
    %546 = vmatmul.mubr.f32.gmra.mxu0 %v429
    %v547 = vpop.f32.mrf.mxu0
    %v548 = vadd.f32 0.0, %v547
    %v549 = vpop.f32.mrf.mxu0
    %550 = vmatprep.mubr.f32.mxu0 0.0
    %551 = vmatmul.mubr.f32.gmra.mxu0 %v430
    %v552 = vpop.f32.mrf.mxu0
    %v553 = vadd.f32 0.0, %v552
    %v554 = vpop.f32.mrf.mxu0
    %555 = vmatprep.mubr.f32.mxu0 0.0
    %556 = vmatmul.mubr.f32.gmra.mxu0 %v431
    %v557 = vpop.f32.mrf.mxu0
    %v558 = vadd.f32 0.0, %v557
    %v559 = vpop.f32.mrf.mxu0
    %560 = vmatprep.mubr.f32.mxu0 0.0
    %561 = vmatmul.mubr.f32.gmra.mxu0 %v432
    %v562 = vpop.f32.mrf.mxu0
    %v563 = vadd.f32 0.0, %v562
    %v564 = vpop.f32.mrf.mxu0
    %565 = vmatprep.mubr.f32.mxu0 0.0
    %566 = vmatmul.mubr.f32.gmra.mxu0 %v433
    %v567 = vpop.f32.mrf.mxu0
    %v568 = vadd.f32 0.0, %v567
    %v569 = vpop.f32.mrf.mxu0
    %570 = vmatprep.mubr.f32.mxu0 0.0
    %571 = vmatmul.mubr.f32.gmra.mxu0 %v434
    %v572 = vpop.f32.mrf.mxu0
    %v573 = vadd.f32 0.0, %v572
    %v574 = vpop.f32.mrf.mxu0
    %575 = vmatprep.mubr.f32.mxu0 0.0
    %576 = vmatmul.mubr.f32.gmra.mxu0 %v435
    %v577 = vpop.f32.mrf.mxu0
    %v578 = vadd.f32 0.0, %v577
    %v579 = vpop.f32.mrf.mxu0
    %580 = vmatprep.mubr.f32.mxu0 0.0
    %581 = vmatmul.mubr.f32.gmra.mxu0 %v436
    %v582 = vpop.f32.mrf.mxu0
    %v583 = vadd.f32 0.0, %v582
    %v584 = vpop.f32.mrf.mxu0
    %585 = vmatprep.mubr.f32.mxu0 0.0
    %586 = vmatmul.mubr.f32.gmra.mxu0 %v437
    %v587 = vpop.f32.mrf.mxu0
    %v588 = vadd.f32 0.0, %v587
    %v589 = vpop.f32.mrf.mxu0
    %590 = vmatprep.mubr.f32.mxu0 0.0
    %591 = vmatmul.mubr.f32.gmra.mxu0 %v438
    %v592 = vpop.f32.mrf.mxu0
    %v593 = vadd.f32 0.0, %v592
    %v594 = vpop.f32.mrf.mxu0
    %595 = vmatprep.mubr.f32.mxu0 0.0
    %596 = vmatmul.mubr.f32.gmra.mxu0 %v439
    %v597 = vpop.f32.mrf.mxu0
    %v598 = vadd.f32 0.0, %v597
    %v599 = vpop.f32.mrf.mxu0
    %600 = vdwg.mxu0
    %v601 = vld [vmem:[%s5] sm:$0x1]
    %v603 = vlaneseq
    %v604 = vshrl.u32 %v603, 7
    %v605 = vsub.s32 0, %v604
    %v606 = vrot.slane %v601, %v605
    %608 = vmatprep.subr.mxu0 0.0
    %609 = vmatpush1.msra.mxu0 %v598
    %610 = vmatprep.subr.mxu0 0.0
    %611 = vmatpush1.msra.mxu0 %v593
    %612 = vmatprep.subr.mxu0 0.0
    %613 = vmatpush1.msra.mxu0 %v588
    %614 = vmatprep.subr.mxu0 0.0
    %615 = vmatpush1.msra.mxu0 %v583
    %616 = vmatprep.subr.mxu0 0.0
    %617 = vmatpush1.msra.mxu0 %v578
    %618 = vmatprep.subr.mxu0 0.0
    %619 = vmatpush1.msra.mxu0 %v573
    %620 = vmatprep.subr.mxu0 0.0
    %621 = vmatpush1.msra.mxu0 %v568
    %622 = vmatprep.subr.mxu0 0.0
    %623 = vmatpush1.msra.mxu0 %v563
    %624 = vmatprep.subr.mxu0 0.0
    %625 = vmatpush1.msra.mxu0 %v558
    %626 = vmatprep.subr.mxu0 0.0
    %627 = vmatpush1.msra.mxu0 %v553
    %628 = vmatprep.subr.mxu0 0.0
    %629 = vmatpush1.msra.mxu0 %v548
    %630 = vmatprep.subr.mxu0 0.0
    %631 = vmatpush1.msra.mxu0 %v543
    %632 = vmatprep.subr.mxu0 0.0
    %633 = vmatpush1.msra.mxu0 %v538
    %634 = vmatprep.subr.mxu0 0.0
    %635 = vmatpush1.msra.mxu0 %v533
    %636 = vmatprep.subr.mxu0 0.0
    %637 = vmatpush1.msra.mxu0 %v528
    %638 = vmatprep.subr.mxu0 0.0
    %639 = vmatpush1.msra.mxu0 %v523
    %640 = vmatprep.subr.mxu0 0.0
    %641 = vmatpush2.msra.mxu0 0.0
    %642 = vmatprep.subr.mxu0 0.0
    %643 = vmatpush2.msra.mxu0 0.0
    %644 = vmatprep.subr.mxu0 0.0
    %645 = vmatpush2.msra.mxu0 0.0
    %646 = vmatprep.subr.mxu0 0.0
    %647 = vmatpush2.msra.mxu0 0.0
    %648 = vmatprep.subr.mxu0 0.0
    %649 = vmatpush2.msra.mxu0 0.0
    %650 = vmatprep.subr.mxu0 0.0
    %651 = vmatpush2.msra.mxu0 0.0
    %652 = vmatprep.subr.mxu0 0.0
    %653 = vmatpush2.msra.mxu0 0.0
    %654 = vmatprep.subr.mxu0 0.0
    %655 = vmatpush2.msra.mxu0 0.0
    %656 = vmatprep.subr.mxu0 0.0
    %657 = vmatpush2.msra.mxu0 0.0
    %658 = vmatprep.subr.mxu0 0.0
    %659 = vmatpush2.msra.mxu0 0.0
    %660 = vmatprep.subr.mxu0 0.0
    %661 = vmatpush2.msra.mxu0 0.0
    %662 = vmatprep.subr.mxu0 0.0
    %663 = vmatpush2.msra.mxu0 0.0
    %664 = vmatprep.subr.mxu0 0.0
    %665 = vmatpush2.msra.mxu0 0.0
    %666 = vmatprep.subr.mxu0 0.0
    %667 = vmatpush2.msra.mxu0 0.0
    %668 = vmatprep.subr.mxu0 0.0
    %669 = vmatpush2.msra.mxu0 0.0
    %670 = vmatprep.subr.mxu0 0.0
    %671 = vmatpush2.msra.mxu0 0.0
    %672 = vmatprep.mubr.f32.mxu0 0.0
    %673 = vmatmul.mubr.f32.gmra.mxu0 %v79
    %v674 = vpop.f32.mrf.mxu0
    %v675 = vadd.f32 %v606, %v674
    %v676 = vpop.f32.mrf.mxu0
    %677 = vmatprep.mubr.f32.mxu0 0.0
    %678 = vmatmul.mubr.f32.gmra.mxu0 %v80
    %v679 = vpop.f32.mrf.mxu0
    %v680 = vadd.f32 %v606, %v679
    %v681 = vpop.f32.mrf.mxu0
    %682 = vmatprep.mubr.f32.mxu0 0.0
    %683 = vmatmul.mubr.f32.gmra.mxu0 %v81
    %v684 = vpop.f32.mrf.mxu0
    %v685 = vadd.f32 %v606, %v684
    %v686 = vpop.f32.mrf.mxu0
    %687 = vmatprep.mubr.f32.mxu0 0.0
    %688 = vmatmul.mubr.f32.gmra.mxu0 %v82
    %v689 = vpop.f32.mrf.mxu0
    %v690 = vadd.f32 %v606, %v689
    %v691 = vpop.f32.mrf.mxu0
    %692 = vmatprep.mubr.f32.mxu0 0.0
    %693 = vmatmul.mubr.f32.gmra.mxu0 %v83
    %v694 = vpop.f32.mrf.mxu0
    %v695 = vadd.f32 %v606, %v694
    %v696 = vpop.f32.mrf.mxu0
    %697 = vmatprep.mubr.f32.mxu0 0.0
    %698 = vmatmul.mubr.f32.gmra.mxu0 %v84
    %v699 = vpop.f32.mrf.mxu0
    %v700 = vadd.f32 %v606, %v699
    %v701 = vpop.f32.mrf.mxu0
    %702 = vmatprep.mubr.f32.mxu0 0.0
    %703 = vmatmul.mubr.f32.gmra.mxu0 %v85
    %v704 = vpop.f32.mrf.mxu0
    %v705 = vadd.f32 %v606, %v704
    %v706 = vpop.f32.mrf.mxu0
    %707 = vmatprep.mubr.f32.mxu0 0.0
    %708 = vmatmul.mubr.f32.gmra.mxu0 %v86
    %v709 = vpop.f32.mrf.mxu0
    %v710 = vadd.f32 %v606, %v709
    %v711 = vpop.f32.mrf.mxu0
    %712 = vmatprep.mubr.f32.mxu0 0.0
    %713 = vmatmul.mubr.f32.gmra.mxu0 %v87
    %v714 = vpop.f32.mrf.mxu0
    %v715 = vadd.f32 %v606, %v714
    %v716 = vpop.f32.mrf.mxu0
    %717 = vmatprep.mubr.f32.mxu0 0.0
    %718 = vmatmul.mubr.f32.gmra.mxu0 %v88
    %v719 = vpop.f32.mrf.mxu0
    %v720 = vadd.f32 %v606, %v719
    %v721 = vpop.f32.mrf.mxu0
    %722 = vmatprep.mubr.f32.mxu0 0.0
    %723 = vmatmul.mubr.f32.gmra.mxu0 %v89
    %v724 = vpop.f32.mrf.mxu0
    %v725 = vadd.f32 %v606, %v724
    %v726 = vpop.f32.mrf.mxu0
    %727 = vmatprep.mubr.f32.mxu0 0.0
    %728 = vmatmul.mubr.f32.gmra.mxu0 %v90
    %v729 = vpop.f32.mrf.mxu0
    %v730 = vadd.f32 %v606, %v729
    %v731 = vpop.f32.mrf.mxu0
    %732 = vmatprep.mubr.f32.mxu0 0.0
    %733 = vmatmul.mubr.f32.gmra.mxu0 %v91
    %v734 = vpop.f32.mrf.mxu0
    %v735 = vadd.f32 %v606, %v734
    %v736 = vpop.f32.mrf.mxu0
    %737 = vmatprep.mubr.f32.mxu0 0.0
    %738 = vmatmul.mubr.f32.gmra.mxu0 %v92
    %v739 = vpop.f32.mrf.mxu0
    %v740 = vadd.f32 %v606, %v739
    %v741 = vpop.f32.mrf.mxu0
    %742 = vmatprep.mubr.f32.mxu0 0.0
    %743 = vmatmul.mubr.f32.gmra.mxu0 %v93
    %v744 = vpop.f32.mrf.mxu0
    %v745 = vadd.f32 %v606, %v744
    %v746 = vpop.f32.mrf.mxu0
    %747 = vmatprep.mubr.f32.mxu0 0.0
    %748 = vmatmul.mubr.f32.gmra.mxu0 %v94
    %v749 = vpop.f32.mrf.mxu0
    %v750 = vadd.f32 %v606, %v749
    %v751 = vpop.f32.mrf.mxu0
    %752 = vdwg.mxu0
    %753 = vst [vmem:[#allocation10] sm:$0xff] %v675
    %754 = vst [vmem:[#allocation10 + $0x8] sm:$0xff] %v680
    %755 = vst [vmem:[#allocation10 + $0x10] sm:$0xff] %v685
    %756 = vst [vmem:[#allocation10 + $0x18] sm:$0xff] %v690
    %757 = vst [vmem:[#allocation10 + $0x20] sm:$0xff] %v695
    %758 = vst [vmem:[#allocation10 + $0x28] sm:$0xff] %v700
    %759 = vst [vmem:[#allocation10 + $0x30] sm:$0xff] %v705
    %760 = vst [vmem:[#allocation10 + $0x38] sm:$0xff] %v710
    %761 = vst [vmem:[#allocation10 + $0x40] sm:$0xff] %v715
    %762 = vst [vmem:[#allocation10 + $0x48] sm:$0xff] %v720
    %763 = vst [vmem:[#allocation10 + $0x50] sm:$0xff] %v725
    %764 = vst [vmem:[#allocation10 + $0x58] sm:$0xff] %v730
    %765 = vst [vmem:[#allocation10 + $0x60] sm:$0xff] %v735
    %766 = vst [vmem:[#allocation10 + $0x68] sm:$0xff] %v740
    %767 = vst [vmem:[#allocation10 + $0x70] sm:$0xff] %v745
    %768 = vst [vmem:[#allocation10 + $0x78] sm:$0xff] %v750
    // Predicated region
    $region42: #{tpu_custom_call.1} parent=1 // pred_check
      _
    $region43: #{tpu_custom_call.1} parent=1 // pred_check_branch
      %770 = sbr.rel (0) target = $region45
    $region44: #{tpu_custom_call.1} parent=1 // pred_region
      %s772 = ssub.s32 2048, 2048
      %773 = vsyncadd [#allocation4], %s772
      %s774 = sshll.u32 [#allocation10], 4
      %s775 = int_to_ptr.vmem [resolvable:$true] %s774
      %780 = dma.vmem_to_hbm [thread:$0]  %s775, 2048, %s6, [#allocation4], 128, 128, 8
    $region45: #{tpu_custom_call.1} parent=1 // pred_fallthru
      _
    // Predicated region
    $region46: #{tpu_custom_call.1} parent=1 // pred_check
      _
    $region47: #{tpu_custom_call.1} parent=1 // pred_check_branch
      %782 = sbr.rel (0) target = $region49
    $region48: #{tpu_custom_call.1} parent=1 // pred_region
      %783 = dma.done [#allocation4], 2048
    $region49: #{tpu_custom_call.1} parent=1 // pred_fallthru
      _
    %784 = vsyncpa [#allocation3], 1
    %785 = vsyncpa [#allocation6], 1
    %786 = vsyncpa [#allocation9], 1
    %787 = vsyncpa [#allocation4], 1

</llo_original>
